<compile_context>
chip_gen: v7x
topology: tpu7x:2x2x1
jax: 0.10.0
libtpu: 0.0.40
codegen_flags: <defaults>
</compile_context>

<pallas_src>
import functools

import jax
import jax.numpy as jnp
from jax.experimental import pallas as pl
from jax.experimental.pallas import tpu as pltpu

_EPS = 1e-6


def _sigmoid(x):
    return 1.0 / (1.0 + jnp.exp(-x))


def _oneplus(x):
    # matches torch.nn.functional.softplus(x, beta=1, threshold=20) + 1
    return jnp.where(x > 20.0, x, jnp.log(1.0 + jnp.exp(jnp.minimum(x, 20.0)))) + 1.0


# --------------------------------------------------------------------------- #
# Pallas kernel: content addressing + write distribution + memory update
# --------------------------------------------------------------------------- #
def _write_head_kernel(mem_ref, vecs_ref, col_ref, out_ref, *, word_length, pack):
    W, P = word_length, pack

    mem = mem_ref[...].astype(jnp.float32)        # [Bb, NP, L]   L = P*W
    vecs = vecs_ref[...]                          # [Bb, 4,  L]   float32
    col = col_ref[...]                            # [Bb, NP, 2P]  float32

    key_b = vecs[:, 0:1, :]                       # beta-scaled key, tiled   [Bb,1,L]
    erase = vecs[:, 1:2, :]                       # sigmoid(erase), tiled    [Bb,1,L]
    wvec = vecs[:, 2:3, :]                        # write vector, tiled      [Bb,1,L]
    k2 = vecs[:, 3:4, 0:1]                        # sum(key^2)               [Bb,1,1]
    cscale = vecs[:, 3:4, 1:2]                    # write_gate*(1-alloc_gate)[Bb,1,1]

    a_bias = col[:, :, 0:P]                       # write_gate*alloc_gate*alloc [Bb,NP,P]
    phi_p = col[:, :, P:2 * P]                    # phi per cell                [Bb,NP,P]

    Bb, NP = mem.shape[0], mem.shape[1]

    # --- content addressing -------------------------------------------------
    prod = mem * key_b                            # full-lane VPU pass
    msq = mem * mem                               # full-lane VPU pass

    # per-cell segment sums over each W-lane segment (static lane slices, XLU)
    dots = jnp.concatenate(
        [jnp.sum(prod[:, :, p * W:(p + 1) * W], axis=-1, keepdims=True)
         for p in range(P)], axis=-1)             # [Bb, NP, P]
    m2 = jnp.concatenate(
        [jnp.sum(msq[:, :, p * W:(p + 1) * W], axis=-1, keepdims=True)
         for p in range(P)], axis=-1)             # [Bb, NP, P]

    # beta is already folded into key_b; rsqrt keeps the divide on the EUP.
    scores = dots * jax.lax.rsqrt(k2 * m2 + _EPS)                     # [Bb, NP, P]

    s_max = jnp.max(jnp.max(scores, axis=2, keepdims=True),
                    axis=1, keepdims=True)                            # [Bb, 1, 1]
    e = jnp.exp(scores - s_max)
    denom = jnp.sum(jnp.sum(e, axis=2, keepdims=True),
                    axis=1, keepdims=True)                            # [Bb, 1, 1]
    content = e * pl.reciprocal(denom, approx=True)                   # [Bb, NP, P]

    # --- write distribution (gates pre-folded in the wrapper) ---------------
    wdist = a_bias + cscale * content                                 # [Bb, NP, P]

    # expand per-cell values back across each cell's W-lane segment
    wdist_e = jnp.concatenate(
        [jnp.broadcast_to(wdist[:, :, p:p + 1], (Bb, NP, W)) for p in range(P)],
        axis=-1)                                                      # [Bb, NP, L]
    phi_e = jnp.concatenate(
        [jnp.broadcast_to(phi_p[:, :, p:p + 1], (Bb, NP, W)) for p in range(P)],
        axis=-1)                                                      # [Bb, NP, L]

    # --- memory update: mem * (1 - w(x)e) * phi + w(x)v ----------------------
    out = mem * (1.0 - wdist_e * erase) * phi_e + wdist_e * wvec
    out_ref[...] = out.astype(out_ref.dtype)


# --------------------------------------------------------------------------- #
# Wrapper helpers
# --------------------------------------------------------------------------- #
def _split_nn_output(nn_output, W, R):
    idx = 0
    parts = []
    for n in (W, W, W, R, 1, 1, 1):
        parts.append(nn_output[:, idx:idx + n])
        idx += n
    return parts  # key, erase, write_vec, free_gates, beta, alloc_gate, write_gate


def _allocation_and_phi(prev_read_dist, free_gates_raw):
    # Fresh sequence: previous write distribution is None and usages start at
    # zero, so the usage update degenerates; the allocation weighting is kept
    # for fidelity with the torch AllocationManager.
    B = prev_read_dist.shape[0]
    N = prev_read_dist.shape[-1]
    free_gates = _sigmoid(free_gates_raw)                                     # [B, R]
    phi = jnp.prod(1.0 - free_gates[:, :, None] * prev_read_dist, axis=1)     # [B, N]
    usages = jnp.zeros((B, N), jnp.float32)
    u = usages * (1.0 - _EPS) + _EPS
    free_list = jnp.argsort(u, axis=-1)
    sorted_u = jnp.take_along_axis(u, free_list, axis=-1)
    u_prod = jnp.cumprod(sorted_u, axis=-1)
    one_minus = 1.0 - sorted_u
    sorted_scores = jnp.concatenate(
        [one_minus[:, :1], one_minus[:, 1:] * u_prod[:, :-1]], axis=-1)
    alloc = jnp.zeros_like(u).at[jnp.arange(B)[:, None], free_list].set(sorted_scores)
    return alloc, phi


def _tpu_generation():
    """Best-effort chip query: (has_two_tensorcores, vmem_capacity_bytes)."""
    two_cores = False
    vmem_cap = 128 << 20
    try:
        kind = (jax.devices()[0].device_kind or "").lower()
        if "v7" in kind or "7x" in kind:
            two_cores = True
    except Exception:
        pass
    try:
        info = pltpu.get_tpu_info()
        vmem_cap = int(getattr(info, "vmem_capacity_bytes", vmem_cap))
    except Exception:
        pass
    return two_cores, vmem_cap


def _vmem_budget_and_limit(two_cores, vmem_cap):
    if two_cores:                    # v7x: 64 MiB VMEM per TensorCore
        budget, limit = 12 << 20, 32 << 20
    else:                            # v5e / v6e: 128 MiB physical, single TC
        budget, limit = 24 << 20, 64 << 20
    budget = min(budget, max(vmem_cap // 4, 4 << 20))
    limit = min(limit, max(vmem_cap - (16 << 20), 16 << 20))
    return budget, limit


def _choose_block_b(B, NP, L, P, mem_dtype, two_cores, vmem_budget_bytes):
    """Batch items per grid step, with padded VMEM footprint fully modeled."""
    dtype_bytes = jnp.dtype(mem_dtype).itemsize
    np_pad = -(-NP // 8) * 8
    l_pad = -(-L // 128) * 128
    mem_item = np_pad * l_pad * dtype_bytes                 # one mem buffer / item
    col_item = np_pad * max(-(-(2 * P) // 128) * 128, 128) * 4   # lanes pad to 128
    vec_item = 8 * l_pad * 4
    # double-buffered: memory in + memory out + col + vecs
    per_item = 2 * (2 * mem_item + col_item + vec_item)
    bb = max(1, int(vmem_budget_bytes // max(per_item, 1)))
    bb = min(bb, B)
    if two_cores and B >= 2:
        bb = min(bb, max(1, B // 2))           # >=2 grid steps for 2 TensorCores
    while B % bb:
        bb -= 1
    if two_cores and B >= 2 and (B // bb) % 2:
        cand = bb - 1                          # prefer an even number of steps
        while cand >= 1 and (B % cand or (B // cand) % 2):
            cand -= 1
        if cand >= 1:
            bb = cand
    return bb


# --------------------------------------------------------------------------- #
# Public wrapper
# --------------------------------------------------------------------------- #
def raw_write_head_forward(memory, nn_output, prev_read_dist, *,
                           word_length, n_read_heads, block_b=None):
    """RawWriteHead forward.

    NOTE: the memory operand is aliased to the output inside the pallas_call
    (input_output_aliases={0: 0}), i.e. it is donated — do not reuse the
    original `memory` array after calling this function under jit.
    """
    B, N, W = memory.shape
    R = n_read_heads
    assert W == word_length and W >= 2

    (key_raw, erase_raw, wvec_raw, fg_raw,
     beta_raw, agate_raw, wgate_raw) = _split_nn_output(nn_output, W, R)

    erase = _sigmoid(erase_raw)                         # [B, W]
    beta = _oneplus(beta_raw)                           # [B, 1]
    agate = _sigmoid(agate_raw)                         # [B, 1]
    wgate = _sigmoid(wgate_raw)                         # [B, 1]

    alloc_dist, phi = _allocation_and_phi(prev_read_dist, fg_raw)   # [B, N] each

    # ---- lane packing: P cells per 128-lane row (fast path when possible) ---
    if W <= 128 and 128 % W == 0 and N % (128 // W) == 0:
        P = 128 // W
    else:
        P = 1   # TODO(synk): general W falls back to masked W-lane layout
    L = P * W
    NP = N // P

    mem_packed = memory.reshape(B, NP, L)               # free view of [B, N, W]

    # ---- pack head parameters (gates folded wrapper-side, all tiny) ---------
    key_beta = (key_raw * beta).astype(jnp.float32)                     # [B, W]
    k2 = jnp.sum(key_raw.astype(jnp.float32) ** 2, axis=-1, keepdims=True)  # [B, 1]
    cscale = (wgate * (1.0 - agate)).astype(jnp.float32)                # [B, 1]
    a_bias = ((wgate * agate) * alloc_dist).astype(jnp.float32)         # [B, N]

    row_key = jnp.tile(key_beta, (1, P))                                # [B, L]
    row_er = jnp.tile(erase.astype(jnp.float32), (1, P))
    row_wv = jnp.tile(wvec_raw.astype(jnp.float32), (1, P))
    row_sc = jnp.concatenate(
        [k2, cscale, jnp.zeros((B, L - 2), jnp.float32)], axis=-1)      # [B, L]
    vecs = jnp.stack([row_key, row_er, row_wv, row_sc], axis=1)         # [B, 4, L]

    col = jnp.concatenate(
        [a_bias.reshape(B, NP, P),
         phi.astype(jnp.float32).reshape(B, NP, P)], axis=-1)           # [B, NP, 2P]

    # ---- generation-aware block sizing & VMEM limit --------------------------
    two_cores, vmem_cap = _tpu_generation()
    vmem_budget, vmem_limit = _vmem_budget_and_limit(two_cores, vmem_cap)
    if block_b is None:
        block_b = _choose_block_b(B, NP, L, P, memory.dtype, two_cores, vmem_budget)
    grid = (B // block_b,)

    mem_spec = pl.BlockSpec((block_b, NP, L), lambda b: (b, 0, 0))
    vec_spec = pl.BlockSpec((block_b, 4, L), lambda b: (b, 0, 0))
    col_spec = pl.BlockSpec((block_b, NP, 2 * P), lambda b: (b, 0, 0))

    kernel = functools.partial(_write_head_kernel, word_length=W, pack=P)
    out_packed = pl.pallas_call(
        kernel,
        out_shape=jax.ShapeDtypeStruct((B, NP, L), memory.dtype),
        grid=grid,
        in_specs=[mem_spec, vec_spec, col_spec],
        out_specs=mem_spec,
        input_output_aliases={0: 0},   # memory is donated to the output
        compiler_params=pltpu.CompilerParams(
            dimension_semantics=("parallel",),
            vmem_limit_bytes=vmem_limit),
    )(mem_packed, vecs, col)

    return out_packed.reshape(B, N, W)


# --------------------------------------------------------------------------- #
# Pure-JAX reference for verification (exact formulas, original eps placement)
# --------------------------------------------------------------------------- #
def raw_write_head_reference(memory, nn_output, prev_read_dist, *,
                             word_length, n_read_heads):
    B, N, W = memory.shape
    R = n_read_heads
    (key_raw, erase_raw, wvec_raw, fg_raw,
     beta_raw, agate_raw, wgate_raw) = _split_nn_output(nn_output, W, R)

    erase = _sigmoid(erase_raw)                    # [B, W]
    beta = _oneplus(beta_raw)                      # [B, 1]
    agate = _sigmoid(agate_raw)                    # [B, 1]
    wgate = _sigmoid(wgate_raw)                    # [B, 1]

    alloc_dist, phi = _allocation_and_phi(prev_read_dist, fg_raw)

    dots = jnp.sum(memory * key_raw[:, None, :], axis=-1)                     # [B, N]
    norms = jnp.sqrt(jnp.sum(key_raw * key_raw, axis=-1, keepdims=True)
                     * jnp.sum(memory * memory, axis=-1))                     # [B, N]
    scores = dots / (norms + _EPS) * beta                                     # [B, N]
    content = jax.nn.softmax(scores, axis=-1)                                 # [B, N]

    wdist = wgate * (agate * alloc_dist + (1.0 - agate) * content)            # [B, N]

    erase_mat = (1.0 - wdist[:, :, None] * erase[:, None, :]) * phi[:, :, None]
    update = wdist[:, :, None] * wvec_raw[:, None, :]
    return memory * erase_mat + update


if __name__ == "__main__":
    B, N, W, R = 2, 16, 32, 2
    rng = jax.random.PRNGKey(0)
    k1, k2, k3 = jax.random.split(rng, 3)

    memory = jax.random.normal(k1, (B, N, W), jnp.float32)
    nn_output = jax.random.normal(k2, (B, 3 * W + R + 3), jnp.float32)
    prev_read_dist = jax.nn.softmax(
        jax.random.normal(k3, (B, R, N), jnp.float32), axis=-1)

    # Reference first (the kernel donates/aliases its memory operand).
    ref = raw_write_head_reference(memory, nn_output, prev_read_dist,
                                   word_length=W, n_read_heads=R)

    fwd = jax.jit(functools.partial(raw_write_head_forward,
                                    word_length=W, n_read_heads=R))
    out = jax.block_until_ready(fwd(memory, nn_output, prev_read_dist))

    assert out.shape == (B, N, W)
    # Tolerance loosened per perf review: approx softmax-normalizer reciprocal
    # (EUP) and rsqrt(k2*m2 + eps) vs the reference's /(sqrt(k2*m2) + eps).
    assert jnp.allclose(out, ref, atol=5e-3, rtol=5e-3), "mismatch vs reference"
    print("KERNEL_OK")
</pallas_src>

<mosaic_0001>
module attributes {stable_mosaic.version = 11 : i64} {
  func.func @_write_head_kernel(%arg0: i32, %arg1: memref<2x4x128xf32, #tpu.memory_space<vmem>>, %arg2: memref<2x4x128xf32, #tpu.memory_space<vmem>>, %arg3: memref<2x4x8xf32, #tpu.memory_space<vmem>>, %arg4: memref<2x4x128xf32, #tpu.memory_space<vmem>>) attributes {dimension_semantics = [#tpu.dimension_semantics<parallel>], iteration_bounds = array<i64: 1>, scalar_prefetch = 0 : i64, scratch_operands = 0 : i64, tpu.core_type = #tpu.core_type<tc>, window_params = [{transform_indices = @transform_0, window_bounds = array<i64: 2, 4, 128>}, {transform_indices = @transform_1, window_bounds = array<i64: 2, 4, 128>}, {transform_indices = @transform_2, window_bounds = array<i64: 2, 4, 8>}, {transform_indices = @transform_3, window_bounds = array<i64: 2, 4, 128>}]} {
    %c0 = arith.constant 0 : index
    %c0_0 = arith.constant 0 : index
    %c0_1 = arith.constant 0 : index
    %0 = vector.load %arg1[%c0, %c0_0, %c0_1] : memref<2x4x128xf32, #tpu.memory_space<vmem>>, vector<2x4x128xf32>
    %c0_2 = arith.constant 0 : index
    %c0_3 = arith.constant 0 : index
    %c0_4 = arith.constant 0 : index
    %1 = vector.load %arg2[%c0_2, %c0_3, %c0_4] : memref<2x4x128xf32, #tpu.memory_space<vmem>>, vector<2x4x128xf32>
    %c0_5 = arith.constant 0 : index
    %c0_6 = arith.constant 0 : index
    %c0_7 = arith.constant 0 : index
    %2 = vector.load %arg3[%c0_5, %c0_6, %c0_7] : memref<2x4x8xf32, #tpu.memory_space<vmem>>, vector<2x4x8xf32>
    %3 = vector.extract_strided_slice %1 {offsets = [0, 0, 0], sizes = [2, 1, 128], strides = [1, 1, 1]} : vector<2x4x128xf32> to vector<2x1x128xf32>
    %4 = vector.extract_strided_slice %1 {offsets = [0, 1, 0], sizes = [2, 1, 128], strides = [1, 1, 1]} : vector<2x4x128xf32> to vector<2x1x128xf32>
    %5 = vector.extract_strided_slice %1 {offsets = [0, 2, 0], sizes = [2, 1, 128], strides = [1, 1, 1]} : vector<2x4x128xf32> to vector<2x1x128xf32>
    %6 = vector.extract_strided_slice %1 {offsets = [0, 3, 0], sizes = [2, 1, 1], strides = [1, 1, 1]} : vector<2x4x128xf32> to vector<2x1x1xf32>
    %7 = vector.extract_strided_slice %1 {offsets = [0, 3, 1], sizes = [2, 1, 1], strides = [1, 1, 1]} : vector<2x4x128xf32> to vector<2x1x1xf32>
    %8 = vector.extract_strided_slice %2 {offsets = [0, 0, 0], sizes = [2, 4, 4], strides = [1, 1, 1]} : vector<2x4x8xf32> to vector<2x4x4xf32>
    %9 = vector.extract_strided_slice %2 {offsets = [0, 0, 4], sizes = [2, 4, 4], strides = [1, 1, 1]} : vector<2x4x8xf32> to vector<2x4x4xf32>
    %10 = vector.broadcast %3 : vector<2x1x128xf32> to vector<2x4x128xf32>
    %11 = arith.mulf %0, %10 : vector<2x4x128xf32>
    %12 = arith.mulf %0, %0 : vector<2x4x128xf32>
    %13 = vector.extract_strided_slice %11 {offsets = [0, 0, 0], sizes = [2, 4, 32], strides = [1, 1, 1]} : vector<2x4x128xf32> to vector<2x4x32xf32>
    %cst = arith.constant dense<0.000000e+00> : vector<2x4xf32>
    %14 = vector.multi_reduction <add>, %13, %cst [2] : vector<2x4x32xf32> to vector<2x4xf32>
    %15 = vector.shape_cast %14 : vector<2x4xf32> to vector<2x4x1xf32>
    %16 = vector.extract_strided_slice %11 {offsets = [0, 0, 32], sizes = [2, 4, 32], strides = [1, 1, 1]} : vector<2x4x128xf32> to vector<2x4x32xf32>
    %cst_8 = arith.constant dense<0.000000e+00> : vector<2x4xf32>
    %17 = vector.multi_reduction <add>, %16, %cst_8 [2] : vector<2x4x32xf32> to vector<2x4xf32>
    %18 = vector.shape_cast %17 : vector<2x4xf32> to vector<2x4x1xf32>
    %19 = vector.extract_strided_slice %11 {offsets = [0, 0, 64], sizes = [2, 4, 32], strides = [1, 1, 1]} : vector<2x4x128xf32> to vector<2x4x32xf32>
    %cst_9 = arith.constant dense<0.000000e+00> : vector<2x4xf32>
    %20 = vector.multi_reduction <add>, %19, %cst_9 [2] : vector<2x4x32xf32> to vector<2x4xf32>
    %21 = vector.shape_cast %20 : vector<2x4xf32> to vector<2x4x1xf32>
    %22 = vector.extract_strided_slice %11 {offsets = [0, 0, 96], sizes = [2, 4, 32], strides = [1, 1, 1]} : vector<2x4x128xf32> to vector<2x4x32xf32>
    %cst_10 = arith.constant dense<0.000000e+00> : vector<2x4xf32>
    %23 = vector.multi_reduction <add>, %22, %cst_10 [2] : vector<2x4x32xf32> to vector<2x4xf32>
    %24 = vector.shape_cast %23 : vector<2x4xf32> to vector<2x4x1xf32>
    %25 = tpu.concatenate %15, %18, %21, %24 in 2 : vector<2x4x1xf32>, vector<2x4x1xf32>, vector<2x4x1xf32>, vector<2x4x1xf32> -> vector<2x4x4xf32>
    %26 = vector.extract_strided_slice %12 {offsets = [0, 0, 0], sizes = [2, 4, 32], strides = [1, 1, 1]} : vector<2x4x128xf32> to vector<2x4x32xf32>
    %cst_11 = arith.constant dense<0.000000e+00> : vector<2x4xf32>
    %27 = vector.multi_reduction <add>, %26, %cst_11 [2] : vector<2x4x32xf32> to vector<2x4xf32>
    %28 = vector.shape_cast %27 : vector<2x4xf32> to vector<2x4x1xf32>
    %29 = vector.extract_strided_slice %12 {offsets = [0, 0, 32], sizes = [2, 4, 32], strides = [1, 1, 1]} : vector<2x4x128xf32> to vector<2x4x32xf32>
    %cst_12 = arith.constant dense<0.000000e+00> : vector<2x4xf32>
    %30 = vector.multi_reduction <add>, %29, %cst_12 [2] : vector<2x4x32xf32> to vector<2x4xf32>
    %31 = vector.shape_cast %30 : vector<2x4xf32> to vector<2x4x1xf32>
    %32 = vector.extract_strided_slice %12 {offsets = [0, 0, 64], sizes = [2, 4, 32], strides = [1, 1, 1]} : vector<2x4x128xf32> to vector<2x4x32xf32>
    %cst_13 = arith.constant dense<0.000000e+00> : vector<2x4xf32>
    %33 = vector.multi_reduction <add>, %32, %cst_13 [2] : vector<2x4x32xf32> to vector<2x4xf32>
    %34 = vector.shape_cast %33 : vector<2x4xf32> to vector<2x4x1xf32>
    %35 = vector.extract_strided_slice %12 {offsets = [0, 0, 96], sizes = [2, 4, 32], strides = [1, 1, 1]} : vector<2x4x128xf32> to vector<2x4x32xf32>
    %cst_14 = arith.constant dense<0.000000e+00> : vector<2x4xf32>
    %36 = vector.multi_reduction <add>, %35, %cst_14 [2] : vector<2x4x32xf32> to vector<2x4xf32>
    %37 = vector.shape_cast %36 : vector<2x4xf32> to vector<2x4x1xf32>
    %38 = tpu.concatenate %28, %31, %34, %37 in 2 : vector<2x4x1xf32>, vector<2x4x1xf32>, vector<2x4x1xf32>, vector<2x4x1xf32> -> vector<2x4x4xf32>
    %39 = vector.broadcast %6 : vector<2x1x1xf32> to vector<2x4x4xf32>
    %40 = arith.mulf %39, %38 : vector<2x4x4xf32>
    %cst_15 = arith.constant 9.99999997E-7 : f32
    %41 = vector.broadcast %cst_15 : f32 to vector<2x4x4xf32>
    %42 = arith.addf %40, %41 : vector<2x4x4xf32>
    %43 = math.rsqrt %42 : vector<2x4x4xf32>
    %44 = arith.mulf %25, %43 : vector<2x4x4xf32>
    %cst_16 = arith.constant dense<0xFF800000> : vector<2x4xf32>
    %45 = vector.multi_reduction <maximumf>, %44, %cst_16 [2] : vector<2x4x4xf32> to vector<2x4xf32>
    %46 = vector.shape_cast %45 : vector<2x4xf32> to vector<2x4x1xf32>
    %cst_17 = arith.constant dense<0xFF800000> : vector<2x1xf32>
    %47 = vector.multi_reduction <maximumf>, %46, %cst_17 [1] : vector<2x4x1xf32> to vector<2x1xf32>
    %48 = vector.shape_cast %47 : vector<2x1xf32> to vector<2x1x1xf32>
    %49 = vector.broadcast %48 : vector<2x1x1xf32> to vector<2x4x4xf32>
    %50 = arith.subf %44, %49 : vector<2x4x4xf32>
    %51 = math.exp %50 : vector<2x4x4xf32>
    %cst_18 = arith.constant dense<0.000000e+00> : vector<2x4xf32>
    %52 = vector.multi_reduction <add>, %51, %cst_18 [2] : vector<2x4x4xf32> to vector<2x4xf32>
    %53 = vector.shape_cast %52 : vector<2x4xf32> to vector<2x4x1xf32>
    %cst_19 = arith.constant dense<0.000000e+00> : vector<2x1xf32>
    %54 = vector.multi_reduction <add>, %53, %cst_19 [1] : vector<2x4x1xf32> to vector<2x1xf32>
    %55 = vector.shape_cast %54 : vector<2x1xf32> to vector<2x1x1xf32>
    %56 = tpu.reciprocal %55 {approx = true} : vector<2x1x1xf32> -> vector<2x1x1xf32>
    %57 = vector.broadcast %56 : vector<2x1x1xf32> to vector<2x4x4xf32>
    %58 = arith.mulf %51, %57 : vector<2x4x4xf32>
    %59 = vector.broadcast %7 : vector<2x1x1xf32> to vector<2x4x4xf32>
    %60 = arith.mulf %59, %58 : vector<2x4x4xf32>
    %61 = arith.addf %8, %60 : vector<2x4x4xf32>
    %62 = vector.extract_strided_slice %61 {offsets = [0, 0, 0], sizes = [2, 4, 1], strides = [1, 1, 1]} : vector<2x4x4xf32> to vector<2x4x1xf32>
    %63 = vector.shape_cast %62 : vector<2x4x1xf32> to vector<2x4x1xf32>
    %64 = vector.broadcast %63 : vector<2x4x1xf32> to vector<2x4x32xf32>
    %65 = vector.extract_strided_slice %61 {offsets = [0, 0, 1], sizes = [2, 4, 1], strides = [1, 1, 1]} : vector<2x4x4xf32> to vector<2x4x1xf32>
    %66 = vector.shape_cast %65 : vector<2x4x1xf32> to vector<2x4x1xf32>
    %67 = vector.broadcast %66 : vector<2x4x1xf32> to vector<2x4x32xf32>
    %68 = vector.extract_strided_slice %61 {offsets = [0, 0, 2], sizes = [2, 4, 1], strides = [1, 1, 1]} : vector<2x4x4xf32> to vector<2x4x1xf32>
    %69 = vector.shape_cast %68 : vector<2x4x1xf32> to vector<2x4x1xf32>
    %70 = vector.broadcast %69 : vector<2x4x1xf32> to vector<2x4x32xf32>
    %71 = vector.extract_strided_slice %61 {offsets = [0, 0, 3], sizes = [2, 4, 1], strides = [1, 1, 1]} : vector<2x4x4xf32> to vector<2x4x1xf32>
    %72 = vector.shape_cast %71 : vector<2x4x1xf32> to vector<2x4x1xf32>
    %73 = vector.broadcast %72 : vector<2x4x1xf32> to vector<2x4x32xf32>
    %74 = tpu.concatenate %64, %67, %70, %73 in 2 : vector<2x4x32xf32>, vector<2x4x32xf32>, vector<2x4x32xf32>, vector<2x4x32xf32> -> vector<2x4x128xf32>
    %75 = vector.extract_strided_slice %9 {offsets = [0, 0, 0], sizes = [2, 4, 1], strides = [1, 1, 1]} : vector<2x4x4xf32> to vector<2x4x1xf32>
    %76 = vector.shape_cast %75 : vector<2x4x1xf32> to vector<2x4x1xf32>
    %77 = vector.broadcast %76 : vector<2x4x1xf32> to vector<2x4x32xf32>
    %78 = vector.extract_strided_slice %9 {offsets = [0, 0, 1], sizes = [2, 4, 1], strides = [1, 1, 1]} : vector<2x4x4xf32> to vector<2x4x1xf32>
    %79 = vector.shape_cast %78 : vector<2x4x1xf32> to vector<2x4x1xf32>
    %80 = vector.broadcast %79 : vector<2x4x1xf32> to vector<2x4x32xf32>
    %81 = vector.extract_strided_slice %9 {offsets = [0, 0, 2], sizes = [2, 4, 1], strides = [1, 1, 1]} : vector<2x4x4xf32> to vector<2x4x1xf32>
    %82 = vector.shape_cast %81 : vector<2x4x1xf32> to vector<2x4x1xf32>
    %83 = vector.broadcast %82 : vector<2x4x1xf32> to vector<2x4x32xf32>
    %84 = vector.extract_strided_slice %9 {offsets = [0, 0, 3], sizes = [2, 4, 1], strides = [1, 1, 1]} : vector<2x4x4xf32> to vector<2x4x1xf32>
    %85 = vector.shape_cast %84 : vector<2x4x1xf32> to vector<2x4x1xf32>
    %86 = vector.broadcast %85 : vector<2x4x1xf32> to vector<2x4x32xf32>
    %87 = tpu.concatenate %77, %80, %83, %86 in 2 : vector<2x4x32xf32>, vector<2x4x32xf32>, vector<2x4x32xf32>, vector<2x4x32xf32> -> vector<2x4x128xf32>
    %88 = vector.broadcast %4 : vector<2x1x128xf32> to vector<2x4x128xf32>
    %89 = arith.mulf %74, %88 : vector<2x4x128xf32>
    %cst_20 = arith.constant 1.000000e+00 : f32
    %90 = vector.broadcast %cst_20 : f32 to vector<2x4x128xf32>
    %91 = arith.subf %90, %89 : vector<2x4x128xf32>
    %92 = arith.mulf %0, %91 : vector<2x4x128xf32>
    %93 = arith.mulf %92, %87 : vector<2x4x128xf32>
    %94 = vector.broadcast %5 : vector<2x1x128xf32> to vector<2x4x128xf32>
    %95 = arith.mulf %74, %94 : vector<2x4x128xf32>
    %96 = arith.addf %93, %95 : vector<2x4x128xf32>
    %c0_21 = arith.constant 0 : index
    %c0_22 = arith.constant 0 : index
    %c0_23 = arith.constant 0 : index
    %97 = vector.load %arg4[%c0_21, %c0_22, %c0_23] : memref<2x4x128xf32, #tpu.memory_space<vmem>>, vector<2x4x128xf32>
    tpu.vector_store %arg4[%c0_21, %c0_22, %c0_23], %96 {strides = array<i32>} : memref<2x4x128xf32, #tpu.memory_space<vmem>>, vector<2x4x128xf32>,
    return
  }
  func.func @transform_0(%arg0: i32) -> (i32, i32, i32) {
    %c0_i32 = arith.constant 0 : i32
    %c0_i32_0 = arith.constant 0 : i32
    %c0_i32_1 = arith.constant 0 : i32
    return %arg0, %c0_i32, %c0_i32_0 : i32, i32, i32
  }
  func.func @transform_1(%arg0: i32) -> (i32, i32, i32) {
    %c0_i32 = arith.constant 0 : i32
    %c0_i32_0 = arith.constant 0 : i32
    %c0_i32_1 = arith.constant 0 : i32
    return %arg0, %c0_i32, %c0_i32_0 : i32, i32, i32
  }
  func.func @transform_2(%arg0: i32) -> (i32, i32, i32) {
    %c0_i32 = arith.constant 0 : i32
    %c0_i32_0 = arith.constant 0 : i32
    %c0_i32_1 = arith.constant 0 : i32
    return %arg0, %c0_i32, %c0_i32_0 : i32, i32, i32
  }
  func.func @transform_3(%arg0: i32) -> (i32, i32, i32) {
    %c0_i32 = arith.constant 0 : i32
    %c0_i32_0 = arith.constant 0 : i32
    %c0_i32_1 = arith.constant 0 : i32
    return %arg0, %c0_i32, %c0_i32_0 : i32, i32, i32
  }
}

</mosaic_0001>

<llo_original>
// kernel: raw_write_head_forward.1
$region0: #{raw_write_head_forward.1}
  #allocation0 [shape = 'u32[]', space=smem, size = 0x4, offset = 0x4, fixed_abs, tag = 'smem constant byte address 0x4 - core index']
  #allocation1 [shape = 'u32[144,128]{1,0:T(1,128)}', space=vmem, size = 0x12000, scoped, tag = 'internal scratch']
  %s0 = inlined_call_operand.hbm [shape: f32[2,4,128], index: 0, kind: input, shape index: {}, may-alias: {0,3}]
  %s1 = inlined_call_operand.hbm [shape: f32[2,4,128], index: 1, kind: input, shape index: {}]
  %s2 = inlined_call_operand.hbm [shape: f32[2,4,8], index: 2, kind: input, shape index: {}]
  %s3 = inlined_call_operand.hbm [shape: f32[2,4,128], index: 3, kind: output, shape index: {}, may-alias: {0,3}]
  %s4 = sld [smem:[#allocation0]]
  $region34: #{raw_write_head_forward.1} parent=0
    _
  %s6 = ssub.s32 1, %s4
  %s7 = scalar_select 0, %s6, %s4
  $region1: #{raw_write_head_forward.1} parent=0
    #allocation2 [shape = 'u8[4096]{0}', space=vmem, size = 0x1000, scoped, tag = 'input window, operand 0, single buffered']
    #allocation3 [shape = 's32[1]{0}', space=sflag, size = 0x4, scoped, tag = 'scoped memory for raw_write_head_forward.1']
    #allocation4 [shape = 's32[1]{0}', space=sflag, size = 0x4, scoped, tag = 'scoped memory for raw_write_head_forward.1']
    #allocation5 [shape = 'u8[4096]{0}', space=vmem, size = 0x1000, scoped, tag = 'input window, operand 1, single buffered']
    #allocation6 [shape = 's32[1]{0}', space=sflag, size = 0x4, scoped, tag = 'scoped memory for raw_write_head_forward.1']
    #allocation7 [shape = 'u8[4096]{0}', space=vmem, size = 0x1000, scoped, tag = 'input window, operand 2, single buffered']
    #allocation8 [shape = 'u8[4096]{0}', space=vmem, size = 0x1000, scoped, tag = 'output window, operand 0, single buffered']
    %8 = vsyncpa [#allocation3], 0
    %9 = vsyncpa [#allocation6], 0
    %10 = vsyncpa [#allocation4], 0
    // Predicated region
    $region2: #{raw_write_head_forward.1} parent=1 // pred_check
      _
    $region3: #{raw_write_head_forward.1} parent=1 // pred_check_branch
      %12 = sbr.rel (0) target = $region5
    $region4: #{raw_write_head_forward.1} parent=1 // pred_region
      %s14 = ssub.s32 128, 128
      %15 = vsyncadd [#allocation3], %s14
      %s16 = sshll.u32 [#allocation2], 4
      %s17 = int_to_ptr.vmem [resolvable:$true] %s16
      %22 = dma.hbm_to_vmem [thread:$0]  %s0, 128, %s17, [#allocation3], 64, 64, 4
    $region5: #{raw_write_head_forward.1} parent=1 // pred_fallthru
      _
    // Predicated region
    $region6: #{raw_write_head_forward.1} parent=1 // pred_check
      _
    $region7: #{raw_write_head_forward.1} parent=1 // pred_check_branch
      %24 = sbr.rel (0) target = $region9
    $region8: #{raw_write_head_forward.1} parent=1 // pred_region
      %s26 = ssub.s32 128, 128
      %27 = vsyncadd [#allocation6], %s26
      %s28 = sshll.u32 [#allocation5], 4
      %s29 = int_to_ptr.vmem [resolvable:$true] %s28
      %34 = dma.hbm_to_vmem [thread:$0]  %s1, 128, %s29, [#allocation6], 64, 64, 4
    $region9: #{raw_write_head_forward.1} parent=1 // pred_fallthru
      _
    // Predicated region
    $region10: #{raw_write_head_forward.1} parent=1 // pred_check
      _
    $region11: #{raw_write_head_forward.1} parent=1 // pred_check_branch
      %36 = sbr.rel (0) target = $region13
    $region12: #{raw_write_head_forward.1} parent=1 // pred_region
      %s38 = ssub.s32 128, 128
      %39 = vsyncadd [#allocation6], %s38
      %s40 = sshll.u32 [#allocation7], 4
      %s41 = int_to_ptr.vmem [resolvable:$true] %s40
      %46 = dma.hbm_to_vmem [thread:$0]  %s2, 128, %s41, [#allocation6], 64, 64, 4
    $region13: #{raw_write_head_forward.1} parent=1 // pred_fallthru
      _
    // Predicated region
    $region14: #{raw_write_head_forward.1} parent=1 // pred_check
      _
    $region15: #{raw_write_head_forward.1} parent=1 // pred_check_branch
      %48 = sbr.rel (0) target = $region17
    $region16: #{raw_write_head_forward.1} parent=1 // pred_region
      %49 = dma.done [#allocation3], 128
    $region17: #{raw_write_head_forward.1} parent=1 // pred_fallthru
      _
    // Predicated region
    $region18: #{raw_write_head_forward.1} parent=1 // pred_check
      _
    $region19: #{raw_write_head_forward.1} parent=1 // pred_check_branch
      %51 = sbr.rel (0) target = $region21
    $region20: #{raw_write_head_forward.1} parent=1 // pred_region
      %52 = dma.done [#allocation6], 128
    $region21: #{raw_write_head_forward.1} parent=1 // pred_fallthru
      _
    // Predicated region
    $region22: #{raw_write_head_forward.1} parent=1 // pred_check
      _
    $region23: #{raw_write_head_forward.1} parent=1 // pred_check_branch
      %54 = sbr.rel (0) target = $region25
    $region24: #{raw_write_head_forward.1} parent=1 // pred_region
      %55 = dma.done [#allocation6], 128
    $region25: #{raw_write_head_forward.1} parent=1 // pred_fallthru
      _
    %v56 = vld [vmem:[#allocation2] sm:$0xf]
    %v57 = vld [vmem:[#allocation2 + $0x4] sm:$0xf]
    %v58 = vld [vmem:[#allocation5] sm:$0xf]
    %v59 = vld [vmem:[#allocation5 + $0x4] sm:$0xf]
    %v60 = vld [vmem:[#allocation7] sm:$0xf]
    %v61 = vld [vmem:[#allocation7 + $0x4] sm:$0xf]
    %v62 = vlaneseq
    %v63 = vshrl.u32 %v62, 7
    %v64 = vsub.s32 0, %v63
    %v65 = vrot.slane %v58, %v64
    %v66 = vlaneseq
    %v67 = vshrl.u32 %v66, 7
    %v68 = vsub.s32 0, %v67
    %v69 = vrot.slane %v59, %v68
    %v70 = vmul.f32 %v56, %v65
    %v71 = vmul.f32 %v57, %v69
    %v72 = vmul.f32 %v56, %v56
    %v73 = vmul.f32 %v57, %v57
    %vm74 = vcmask 257024
    %v75 = vsel %vm74, %v70, 0.0
    %76 = vadd.xlane.f32.xlu0 %v75
    %v77 = vpop.xlane.xlu0 %76
    %v78 = vsel %vm74, %v71, 0.0
    %79 = vadd.xlane.f32.xlu0 %v78
    %v80 = vpop.xlane.xlu0 %79
    %83 = vrot.lane.b32.xlu0 %v70, 96
    %v84 = vpop.permute.xlu0 %83
    %85 = vrot.lane.b32.xlu0 %v71, 96
    %v86 = vpop.permute.xlu0 %85
    %v89 = vsel %vm74, %v84, 0.0
    %90 = vadd.xlane.f32.xlu0 %v89
    %v91 = vpop.xlane.xlu0 %90
    %v92 = vsel %vm74, %v86, 0.0
    %93 = vadd.xlane.f32.xlu0 %v92
    %v94 = vpop.xlane.xlu0 %93
    %95 = vrot.lane.b32.xlu0 %v70, 64
    %v96 = vpop.permute.xlu0 %95
    %97 = vrot.lane.b32.xlu0 %v71, 64
    %v98 = vpop.permute.xlu0 %97
    %v101 = vsel %vm74, %v96, 0.0
    %102 = vadd.xlane.f32.xlu0 %v101
    %v103 = vpop.xlane.xlu0 %102
    %v104 = vsel %vm74, %v98, 0.0
    %105 = vadd.xlane.f32.xlu0 %v104
    %v106 = vpop.xlane.xlu0 %105
    %107 = vrot.lane.b32.xlu0 %v70, 32
    %v108 = vpop.permute.xlu0 %107
    %109 = vrot.lane.b32.xlu0 %v71, 32
    %v110 = vpop.permute.xlu0 %109
    %v113 = vsel %vm74, %v108, 0.0
    %114 = vadd.xlane.f32.xlu0 %v113
    %v115 = vpop.xlane.xlu0 %114
    %v116 = vsel %vm74, %v110, 0.0
    %117 = vadd.xlane.f32.xlu0 %v116
    %v118 = vpop.xlane.xlu0 %117
    %vm119 = vcmask 7168
    %v120 = vsel %vm119, %v77, %v91
    %v121 = vsel %vm119, %v80, %v94
    %vm122 = vcmask 15360
    %v123 = vsel %vm122, %v120, %v103
    %v124 = vsel %vm122, %v121, %v106
    %vm125 = vcmask 23552
    %v126 = vsel %vm125, %v123, %v115
    %v127 = vsel %vm125, %v124, %v118
    %v128 = vsel %vm74, %v72, 0.0
    %129 = vadd.xlane.f32.xlu0 %v128
    %v130 = vpop.xlane.xlu0 %129
    %v131 = vsel %vm74, %v73, 0.0
    %132 = vadd.xlane.f32.xlu0 %v131
    %v133 = vpop.xlane.xlu0 %132
    %136 = vrot.lane.b32.xlu0 %v72, 96
    %v137 = vpop.permute.xlu0 %136
    %138 = vrot.lane.b32.xlu0 %v73, 96
    %v139 = vpop.permute.xlu0 %138
    %v142 = vsel %vm74, %v137, 0.0
    %143 = vadd.xlane.f32.xlu0 %v142
    %v144 = vpop.xlane.xlu0 %143
    %v145 = vsel %vm74, %v139, 0.0
    %146 = vadd.xlane.f32.xlu0 %v145
    %v147 = vpop.xlane.xlu0 %146
    %148 = vrot.lane.b32.xlu0 %v72, 64
    %v149 = vpop.permute.xlu0 %148
    %150 = vrot.lane.b32.xlu0 %v73, 64
    %v151 = vpop.permute.xlu0 %150
    %v154 = vsel %vm74, %v149, 0.0
    %155 = vadd.xlane.f32.xlu0 %v154
    %v156 = vpop.xlane.xlu0 %155
    %v157 = vsel %vm74, %v151, 0.0
    %158 = vadd.xlane.f32.xlu0 %v157
    %v159 = vpop.xlane.xlu0 %158
    %160 = vrot.lane.b32.xlu0 %v72, 32
    %v161 = vpop.permute.xlu0 %160
    %162 = vrot.lane.b32.xlu0 %v73, 32
    %v163 = vpop.permute.xlu0 %162
    %v166 = vsel %vm74, %v161, 0.0
    %167 = vadd.xlane.f32.xlu0 %v166
    %v168 = vpop.xlane.xlu0 %167
    %v169 = vsel %vm74, %v163, 0.0
    %170 = vadd.xlane.f32.xlu0 %v169
    %v171 = vpop.xlane.xlu0 %170
    %v172 = vsel %vm119, %v130, %v144
    %v173 = vsel %vm119, %v133, %v147
    %v174 = vsel %vm122, %v172, %v156
    %v175 = vsel %vm122, %v173, %v159
    %v176 = vsel %vm125, %v174, %v168
    %v177 = vsel %vm125, %v175, %v171
    %v180 = vrot.slane %v58, 3
    %v181 = vrot.slane %v59, 3
    %s182 = vtos %v180
    %v183 = vstv %s182
    %s185 = vtos %v181
    %v186 = vstv %s185
    %v188 = vmul.f32 %v183, %v176
    %v189 = vmul.f32 %v186, %v177
    %v190 = vadd.f32 %v188, 1e-06
    %v191 = vadd.f32 %v189, 1e-06
    %v192 = vrsqrt.pop %v190
    %v193 = vrsqrt.pop %v191
    %v194 = vmul.f32 %v126, %v192
    %v195 = vmul.f32 %v127, %v193
    %vm196 = vcmask 27648
    %v197 = vsel %vm196, %v194, -inf
    %198 = vmax.xlane.f32.xlu0 %v197
    %v199 = vpop.xlane.xlu0 %198
    %v200 = vsel %vm196, %v195, -inf
    %201 = vmax.xlane.f32.xlu0 %v200
    %v202 = vpop.xlane.xlu0 %201
    %vm203 = vcmask 1043456
    %v204 = vsel %vm203, %v199, -inf
    %v205 = vrot.slane %v204, 4
    %v206 = vmax.f32 %v204, %v205
    %v207 = vrot.slane %v206, 2
    %v208 = vmax.f32 %v206, %v207
    %v209 = vrot.slane %v208, 1
    %v210 = vmax.f32 %v208, %v209
    %v211 = vsel %vm203, %v202, -inf
    %v212 = vrot.slane %v211, 4
    %v213 = vmax.f32 %v211, %v212
    %v214 = vrot.slane %v213, 2
    %v215 = vmax.f32 %v213, %v214
    %v216 = vrot.slane %v215, 1
    %v217 = vmax.f32 %v215, %v216
    %v218 = vsub.f32 %v194, %v210
    %v219 = vsub.f32 %v195, %v217
    %v220 = vmul.f32 %v218, 1.442695
    %v221 = vpow.pop %v220
    %v222 = vmul.f32 %v219, 1.442695
    %v223 = vpow.pop %v222
    %v224 = vsel %vm196, %v221, 0.0
    %225 = vadd.xlane.f32.xlu0 %v224
    %v226 = vpop.xlane.xlu0 %225
    %v227 = vsel %vm196, %v223, 0.0
    %228 = vadd.xlane.f32.xlu0 %v227
    %v229 = vpop.xlane.xlu0 %228
    %v230 = vsel %vm203, %v226, 0.0
    %v231 = vrot.slane %v230, 4
    %v232 = vadd.f32 %v230, %v231
    %v233 = vrot.slane %v232, 2
    %v234 = vadd.f32 %v232, %v233
    %v235 = vrot.slane %v234, 1
    %v236 = vadd.f32 %v234, %v235
    %v237 = vsel %vm203, %v229, 0.0
    %v238 = vrot.slane %v237, 4
    %v239 = vadd.f32 %v237, %v238
    %v240 = vrot.slane %v239, 2
    %v241 = vadd.f32 %v239, %v240
    %v242 = vrot.slane %v241, 1
    %v243 = vadd.f32 %v241, %v242
    %v244 = vrcp.pop %v236
    %v245 = vrcp.pop %v243
    %v246 = vmul.f32 %v221, %v244
    %v247 = vmul.f32 %v223, %v245
    %248 = vrot.lane.b32.xlu0 %v180, 127
    %v249 = vpop.permute.xlu0 %248
    %250 = vrot.lane.b32.xlu0 %v181, 127
    %v251 = vpop.permute.xlu0 %250
    %s252 = vtos %v249
    %v253 = vstv %s252
    %s255 = vtos %v251
    %v256 = vstv %s255
    %v258 = vmul.f32 %v253, %v246
    %v259 = vmul.f32 %v256, %v247
    %v260 = vadd.f32 %v60, %v258
    %v261 = vadd.f32 %v61, %v259
    %263 = vset.pattern.permute.xlu0 0
    %264 = vperm.xlu0 %263, %v260
    %v265 = vpop.permute.xlu0 %264
    %268 = vset.pattern.permute.xlu0 0
    %269 = vperm.xlu0 %268, %v261
    %v270 = vpop.permute.xlu0 %269
    %272 = vset.pattern.permute.xlu0 1
    %273 = vperm.xlu0 %272, %v260
    %v274 = vpop.permute.xlu0 %273
    %276 = vset.pattern.permute.xlu0 1
    %277 = vperm.xlu0 %276, %v261
    %v278 = vpop.permute.xlu0 %277
    %280 = vset.pattern.permute.xlu0 2
    %281 = vperm.xlu0 %280, %v260
    %v282 = vpop.permute.xlu0 %281
    %284 = vset.pattern.permute.xlu0 2
    %285 = vperm.xlu0 %284, %v261
    %v286 = vpop.permute.xlu0 %285
    %288 = vset.pattern.permute.xlu0 3
    %289 = vperm.xlu0 %288, %v260
    %v290 = vpop.permute.xlu0 %289
    %292 = vset.pattern.permute.xlu0 3
    %293 = vperm.xlu0 %292, %v261
    %v294 = vpop.permute.xlu0 %293
    %vm296 = vcmask 261120
    %v297 = vsel %vm296, %v265, %v274
    %v298 = vsel %vm296, %v270, %v278
    %vm299 = vcmask 523264
    %v300 = vsel %vm299, %v297, %v282
    %v301 = vsel %vm299, %v298, %v286
    %vm302 = vcmask 785408
    %v303 = vsel %vm302, %v300, %v290
    %v304 = vsel %vm302, %v301, %v294
    %306 = vset.pattern.permute.xlu0 4
    %307 = vperm.xlu0 %306, %v60
    %v308 = vpop.permute.xlu0 %307
    %311 = vset.pattern.permute.xlu0 4
    %312 = vperm.xlu0 %311, %v61
    %v313 = vpop.permute.xlu0 %312
    %315 = vset.pattern.permute.xlu0 5
    %316 = vperm.xlu0 %315, %v60
    %v317 = vpop.permute.xlu0 %316
    %319 = vset.pattern.permute.xlu0 5
    %320 = vperm.xlu0 %319, %v61
    %v321 = vpop.permute.xlu0 %320
    %323 = vset.pattern.permute.xlu0 6
    %324 = vperm.xlu0 %323, %v60
    %v325 = vpop.permute.xlu0 %324
    %327 = vset.pattern.permute.xlu0 6
    %328 = vperm.xlu0 %327, %v61
    %v329 = vpop.permute.xlu0 %328
    %331 = vset.pattern.permute.xlu0 7
    %332 = vperm.xlu0 %331, %v60
    %v333 = vpop.permute.xlu0 %332
    %335 = vset.pattern.permute.xlu0 7
    %336 = vperm.xlu0 %335, %v61
    %v337 = vpop.permute.xlu0 %336
    %v339 = vsel %vm296, %v308, %v317
    %v340 = vsel %vm296, %v313, %v321
    %v341 = vsel %vm299, %v339, %v325
    %v342 = vsel %vm299, %v340, %v329
    %v343 = vsel %vm302, %v341, %v333
    %v344 = vsel %vm302, %v342, %v337
    %v345 = vlaneseq
    %v346 = vshrl.u32 %v345, 7
    %v347 = vsub.s32 1, %v346
    %v348 = vrot.slane %v58, %v347
    %v349 = vlaneseq
    %v350 = vshrl.u32 %v349, 7
    %v351 = vsub.s32 1, %v350
    %v352 = vrot.slane %v59, %v351
    %v353 = vmul.f32 %v303, %v348
    %v354 = vmul.f32 %v304, %v352
    %v355 = vsub.f32 1.0, %v353
    %v356 = vsub.f32 1.0, %v354
    %v357 = vmul.f32 %v56, %v355
    %v358 = vmul.f32 %v57, %v356
    %v359 = vmul.f32 %v357, %v343
    %v360 = vmul.f32 %v358, %v344
    %v361 = vlaneseq
    %v362 = vshrl.u32 %v361, 7
    %v363 = vsub.s32 2, %v362
    %v364 = vrot.slane %v58, %v363
    %v365 = vlaneseq
    %v366 = vshrl.u32 %v365, 7
    %v367 = vsub.s32 2, %v366
    %v368 = vrot.slane %v59, %v367
    %v369 = vmul.f32 %v303, %v364
    %v370 = vmul.f32 %v304, %v368
    %v371 = vadd.f32 %v359, %v369
    %v372 = vadd.f32 %v360, %v370
    %373 = vst [vmem:[#allocation8] sm:$0xf] %v371
    %374 = vst [vmem:[#allocation8 + $0x4] sm:$0xf] %v372
    // Predicated region
    $region26: #{raw_write_head_forward.1} parent=1 // pred_check
      _
    $region27: #{raw_write_head_forward.1} parent=1 // pred_check_branch
      %376 = sbr.rel (0) target = $region29
    $region28: #{raw_write_head_forward.1} parent=1 // pred_region
      %s378 = ssub.s32 128, 128
      %379 = vsyncadd [#allocation4], %s378
      %s380 = sshll.u32 [#allocation8], 4
      %s381 = int_to_ptr.vmem [resolvable:$true] %s380
      %386 = dma.vmem_to_hbm [thread:$0]  %s381, 128, %s3, [#allocation4], 64, 64, 4
    $region29: #{raw_write_head_forward.1} parent=1 // pred_fallthru
      _
    // Predicated region
    $region30: #{raw_write_head_forward.1} parent=1 // pred_check
      _
    $region31: #{raw_write_head_forward.1} parent=1 // pred_check_branch
      %388 = sbr.rel (0) target = $region33
    $region32: #{raw_write_head_forward.1} parent=1 // pred_region
      %389 = dma.done [#allocation4], 128
    $region33: #{raw_write_head_forward.1} parent=1 // pred_fallthru
      _
    %390 = vsyncpa [#allocation3], 1
    %391 = vsyncpa [#allocation6], 1
    %392 = vsyncpa [#allocation4], 1

</llo_original>
